<compile_context>
chip_gen: v5e
topology: v5e:2x2
jax: 0.10.0
libtpu: 0.0.40
codegen_flags: <defaults>
</compile_context>

<pallas_src>
import functools

import jax
import jax.numpy as jnp
from jax.experimental import pallas as pl
from jax.experimental.pallas import tpu as pltpu

_LANE = 128


def _cab_kernel(x_ref, w1_ref, w2_ref, o_ref, sum_acc, max_acc, *,
                s, ts, nk, ragged, unroll):
    """One (batch, spatial-tile) grid step.

    x_ref:   (1, C, TS) block of the (N, C, S) input.
    w1_ref:  (Cr, C)  fc1 weight.   w2_ref: (Cout, Cr)  fc2 weight.
    o_ref:   (1, Cout, 1) output block (written on the last spatial tile).
    sum_acc: (C, 128) float32 scratch  -- streamed running sum.
    max_acc: (C, 128) input-dtype scratch -- streamed running max.
    """
    k = pl.program_id(1)

    def mlp_and_store(avg, mx):
        # avg, mx: (C, 1) float32.  Merge into one (C, 2) RHS so the tiny
        # fc1/fc2 matmuls are issued once each instead of twice.
        c = avg.shape[0]
        col = jax.lax.broadcasted_iota(jnp.int32, (c, 2), 1)
        pooled = jnp.where(col == 0, avg, mx)                          # (C, 2)
        w1 = w1_ref[...].astype(jnp.float32)                           # (Cr, C)
        w2 = w2_ref[...].astype(jnp.float32)                           # (Cout, Cr)
        h = jnp.maximum(jnp.dot(w1, pooled,
                                preferred_element_type=jnp.float32), 0.0)   # (Cr, 2)
        y2 = jnp.dot(w2, h, preferred_element_type=jnp.float32)        # (Cout, 2)
        y = jax.nn.sigmoid(jnp.sum(y2, axis=-1, keepdims=True))        # (Cout, 1)
        o_ref[0] = y.astype(o_ref.dtype)

    if nk == 1 and not ragged:
        # Single tile covering the whole spatial extent: direct reduce, no scratch.
        x = x_ref[0]                                                    # (C, S)
        avg = jnp.sum(x.astype(jnp.float32), axis=-1, keepdims=True) * (1.0 / s)
        mx = jnp.max(x, axis=-1, keepdims=True).astype(jnp.float32)
        mlp_and_store(avg, mx)
        return

    # --- Streaming path (ts is a multiple of 128). ---
    n_chunks = ts // _LANE
    last = nk - 1

    @pl.when(k == 0)
    def _init():
        sum_acc[...] = jnp.zeros(sum_acc.shape, sum_acc.dtype)
        max_acc[...] = jnp.full(max_acc.shape, -jnp.inf, max_acc.dtype)

    def accumulate(masked):
        def chunk(i, carry):
            sa, ma = carry
            start = i * _LANE
            if not isinstance(start, int):
                start = pl.multiple_of(start, _LANE)
            xc = x_ref[0, :, pl.ds(start, _LANE)]                       # (C, 128)
            if masked:
                pos = jax.lax.broadcasted_iota(jnp.int32, xc.shape, 1) + (k * ts + start)
                ok = pos < s
                sa = sa + jnp.where(ok, xc.astype(jnp.float32), 0.0)
                ma = jnp.maximum(ma, jnp.where(ok, xc, jnp.array(-jnp.inf, xc.dtype)))
            else:
                sa = sa + xc.astype(jnp.float32)
                ma = jnp.maximum(ma, xc)
            return sa, ma

        init = (sum_acc[...], max_acc[...])        # one scratch read per step
        if n_chunks == 1:
            sa, ma = chunk(0, init)
        else:
            sa, ma = jax.lax.fori_loop(0, n_chunks, chunk, init,
                                       unroll=min(unroll, n_chunks))
        sum_acc[...] = sa                          # one scratch write per step
        max_acc[...] = ma

    if not ragged:
        accumulate(masked=False)
    elif nk == 1:
        accumulate(masked=True)
    else:
        @pl.when(k < last)
        def _full_tiles():
            accumulate(masked=False)               # no mask cost on full tiles

        @pl.when(k == last)
        def _ragged_tail():
            accumulate(masked=True)                # mask only the final tile

    def _finalize():
        avg = jnp.sum(sum_acc[...], axis=-1, keepdims=True) * (1.0 / s)          # (C, 1)
        mx = jnp.max(max_acc[...], axis=-1, keepdims=True).astype(jnp.float32)   # (C, 1)
        mlp_and_store(avg, mx)

    if nk == 1:
        _finalize()
    else:
        pl.when(k == last)(_finalize)


def _pick_spatial_tile(s, c, itemsize, target_bytes=4 * 1024 * 1024):
    """Lane-aligned spatial tile targeting ~4 MiB per x block.

    Big enough to amortize the ~0.35 us/grid-step pipeline overhead, small
    enough that the double-buffered block stays well inside v7x's 64 MiB VMEM
    (32 MiB scoped default); fine for v5e/v6e too.
    """
    if s * c * itemsize <= target_bytes:
        return s                                   # whole spatial extent in one block
    ts = (target_bytes // (c * itemsize)) // _LANE * _LANE
    return max(_LANE, ts)


@functools.partial(jax.jit, static_argnames=("spatial_tile",))
def cab_forward(x_ncdhw, w1, w2, *, spatial_tile=None):
    """CAB forward.

    x_ncdhw: (N, C, D, H, W)
    w1: (Cr, C)     -- fc1 Conv3d weight, squeezed from (Cr, C, 1, 1, 1)
    w2: (Cout, Cr)  -- fc2 Conv3d weight, squeezed from (Cout, Cr, 1, 1, 1)
    Returns (N, Cout, 1, 1, 1), matching the PyTorch module output.
    """
    n, c, d, h, w = x_ncdhw.shape
    s = d * h * w
    c_r, c_in = w1.shape
    c_out, c_r2 = w2.shape
    if c_in != c or c_r2 != c_r:
        raise ValueError("weight shapes inconsistent with input channels")

    x_ncs = x_ncdhw.reshape(n, c, s)               # free, metadata-only reshape
    itemsize = jnp.dtype(x_ncdhw.dtype).itemsize

    if spatial_tile is None:
        ts = _pick_spatial_tile(s, c, itemsize)
    else:
        ts = int(spatial_tile)
        if ts != s and ts % _LANE != 0:
            raise ValueError("spatial_tile must equal D*H*W or be a multiple of 128")
    nk = pl.cdiv(s, ts)
    ragged = (nk * ts) != s

    kernel = functools.partial(_cab_kernel, s=s, ts=ts, nk=nk, ragged=ragged, unroll=8)

    w_item = jnp.dtype(w1.dtype).itemsize
    vmem_need = (2 * c * ts * itemsize                        # double-buffered x block
                 + 2 * (c_r * c + c_out * c_r) * w_item       # weights
                 + c * _LANE * (4 + itemsize)                 # sum/max scratch
                 + 2 * c_out * itemsize)                      # output
    vmem_limit = int(min(100 * 2 ** 20, max(32 * 2 ** 20, 2 * vmem_need)))

    cost = pl.CostEstimate(
        flops=2 * n * s * c + 4 * n * (c * c_r + c_r * c_out),
        transcendentals=n * c_out,
        bytes_accessed=n * s * c * itemsize
        + (c * c_r + c_r * c_out) * w_item
        + n * c_out * itemsize,
    )

    out = pl.pallas_call(
        kernel,
        out_shape=jax.ShapeDtypeStruct((n, c_out, 1), x_ncdhw.dtype),
        grid_spec=pltpu.PrefetchScalarGridSpec(
            num_scalar_prefetch=0,
            grid=(n, nk),                                     # spatial (reduction) axis last
            in_specs=[
                pl.BlockSpec((1, c, ts), lambda b, k: (b, 0, k)),
                pl.BlockSpec((c_r, c), lambda b, k: (0, 0)),
                pl.BlockSpec((c_out, c_r), lambda b, k: (0, 0)),
            ],
            out_specs=pl.BlockSpec((1, c_out, 1), lambda b, k: (b, 0, 0)),
            scratch_shapes=[
                pltpu.VMEM((c, _LANE), jnp.float32),          # running sum (f32)
                pltpu.VMEM((c, _LANE), x_ncdhw.dtype),        # running max (input dtype)
            ],
        ),
        compiler_params=pltpu.CompilerParams(
            dimension_semantics=("parallel", "arbitrary"),
            vmem_limit_bytes=vmem_limit,
        ),
        cost_estimate=cost,
    )(x_ncs, w1, w2)

    return out.reshape(n, c_out, 1, 1, 1)


def cab_reference(x_ncdhw, w1, w2):
    """Pure-JAX reference mirroring the PyTorch forward."""
    xf = x_ncdhw.astype(jnp.float32)
    avg = jnp.mean(xf, axis=(2, 3, 4))                        # (N, C)
    mx = jnp.max(xf, axis=(2, 3, 4))                          # (N, C)

    def mlp(v):
        h = jnp.maximum(v @ w1.astype(jnp.float32).T, 0.0)
        return h @ w2.astype(jnp.float32).T

    out = jax.nn.sigmoid(mlp(avg) + mlp(mx))
    n, c_out = out.shape
    return out.reshape(n, c_out, 1, 1, 1).astype(x_ncdhw.dtype)


if __name__ == "__main__":
    # Module config: in_channels=32, ratio=16 -> reduced_channels=2, out=32.
    N, C, D, H, W = 2, 32, 4, 8, 8
    ratio = 16
    C_r = C // ratio
    C_out = C

    key = jax.random.PRNGKey(0)
    kx, k1, k2, kx2, kx3 = jax.random.split(key, 5)

    x = jax.random.normal(kx, (N, C, D, H, W), dtype=jnp.float32)

    # Conv3d weights (bias=False), squeezed from (out, in, 1, 1, 1) -> (out, in).
    bound1 = 1.0 / (C ** 0.5)
    bound2 = 1.0 / (C_r ** 0.5)
    w1 = jax.random.uniform(k1, (C_r, C), jnp.float32, -bound1, bound1)
    w2 = jax.random.uniform(k2, (C_out, C_r), jnp.float32, -bound2, bound2)

    # 1) Small S -> single-tile direct-reduce path.
    out = cab_forward(x, w1, w2)
    jax.block_until_ready(out)
    ref = cab_reference(x, w1, w2)
    assert out.shape == (N, C_out, 1, 1, 1)
    assert jnp.allclose(out, ref, atol=1e-5, rtol=1e-5)

    # 2) Streamed multi-tile path with a ragged last tile (S = 5*7*9 = 315, TS = 128).
    x2 = jax.random.normal(kx2, (N, C, 5, 7, 9), dtype=jnp.float32)
    out2 = cab_forward(x2, w1, w2, spatial_tile=128)
    jax.block_until_ready(out2)
    ref2 = cab_reference(x2, w1, w2)
    assert jnp.allclose(out2, ref2, atol=1e-5, rtol=1e-5)

    # 3) bf16 streamed path exercising the chunked fori_loop (TS=1024 -> 8 chunks/step)
    #    plus a masked ragged tail (S = 8*20*20 = 3200, nk = 4).
    x3 = jax.random.normal(kx3, (1, C, 8, 20, 20), dtype=jnp.bfloat16)
    out3 = cab_forward(x3, w1, w2, spatial_tile=1024)
    jax.block_until_ready(out3)
    ref3 = cab_reference(x3, w1, w2)
    assert jnp.allclose(out3.astype(jnp.float32), ref3.astype(jnp.float32),
                        atol=2e-2, rtol=2e-2)

    print("KERNEL_OK")
</pallas_src>

<mosaic_0001>
module attributes {stable_mosaic.version = 11 : i64} {
  func.func @_cab_kernel(%arg0: i32, %arg1: i32, %arg2: memref<1x32x256xf32, #tpu.memory_space<vmem>>, %arg3: memref<2x32xf32, #tpu.memory_space<vmem>>, %arg4: memref<32x2xf32, #tpu.memory_space<vmem>>, %arg5: memref<1x32x1xf32, #tpu.memory_space<vmem>>, %arg6: memref<32x128xf32, #tpu.memory_space<vmem>>, %arg7: memref<32x128xf32, #tpu.memory_space<vmem>>) attributes {dimension_semantics = [#tpu.dimension_semantics<parallel>, #tpu.dimension_semantics<arbitrary>], iteration_bounds = array<i64: 2, 1>, scalar_prefetch = 0 : i64, scratch_operands = 2 : i64, tpu.core_type = #tpu.core_type<tc>, window_params = [{transform_indices = @transform_0, window_bounds = array<i64: 1, 32, 256>}, {pipeline_mode = #tpu.pipeline_mode<synchronous>, transform_indices = @transform_1, window_bounds = array<i64: 2, 32>}, {pipeline_mode = #tpu.pipeline_mode<synchronous>, transform_indices = @transform_2, window_bounds = array<i64: 32, 2>}, {transform_indices = @transform_3, window_bounds = array<i64: 1, 32, 1>}]} {
    %c0 = arith.constant 0 : index
    %c0_0 = arith.constant 0 : index
    %c0_1 = arith.constant 0 : index
    %0 = vector.load %arg2[%c0, %c0_0, %c0_1] : memref<1x32x256xf32, #tpu.memory_space<vmem>>, vector<1x32x256xf32>
    %1 = vector.shape_cast %0 : vector<1x32x256xf32> to vector<32x256xf32>
    %cst = arith.constant dense<0.000000e+00> : vector<32xf32>
    %2 = vector.multi_reduction <add>, %1, %cst [1] : vector<32x256xf32> to vector<32xf32>
    %3 = vector.shape_cast %2 : vector<32xf32> to vector<32x1xf32>
    %cst_2 = arith.constant 3.906250e-03 : f32
    %4 = vector.broadcast %cst_2 : f32 to vector<32x1xf32>
    %5 = arith.mulf %3, %4 : vector<32x1xf32>
    %cst_3 = arith.constant dense<0xFF800000> : vector<32xf32>
    %6 = vector.multi_reduction <maximumf>, %1, %cst_3 [1] : vector<32x256xf32> to vector<32xf32>
    %7 = vector.shape_cast %6 : vector<32xf32> to vector<32x1xf32>
    %8 = tpu.iota {dimensions = array<i32: 1>} : vector<32x2xi32>
    %c0_i32 = arith.constant 0 : i32
    %9 = vector.broadcast %c0_i32 : i32 to vector<32x2xi32>
    %10 = arith.cmpi eq, %8, %9 : vector<32x2xi32>
    %11 = vector.shape_cast %5 : vector<32x1xf32> to vector<32x1xf32>
    %12 = vector.broadcast %11 : vector<32x1xf32> to vector<32x2xf32>
    %13 = vector.shape_cast %7 : vector<32x1xf32> to vector<32x1xf32>
    %14 = vector.broadcast %13 : vector<32x1xf32> to vector<32x2xf32>
    %15 = arith.select %10, %12, %14 : vector<32x2xi1>, vector<32x2xf32>
    %c0_4 = arith.constant 0 : index
    %c0_5 = arith.constant 0 : index
    %16 = vector.load %arg3[%c0_4, %c0_5] : memref<2x32xf32, #tpu.memory_space<vmem>>, vector<2x32xf32>
    %c0_6 = arith.constant 0 : index
    %c0_7 = arith.constant 0 : index
    %17 = vector.load %arg4[%c0_6, %c0_7] : memref<32x2xf32, #tpu.memory_space<vmem>>, vector<32x2xf32>
    %cst_8 = arith.constant dense<0.000000e+00> : vector<2x2xf32>
    %18 = tpu.matmul %16, %15, %cst_8 {dimension_numbers = #tpu.dot_dimension_numbers<[1], [0], [0], [1], [0, 0, 1, 1], [], []>} : vector<2x32xf32>, vector<32x2xf32>, vector<2x2xf32> -> vector<2x2xf32>
    %cst_9 = arith.constant 0.000000e+00 : f32
    %19 = vector.broadcast %cst_9 : f32 to vector<2x2xf32>
    %20 = arith.maximumf %18, %19 : vector<2x2xf32>
    %cst_10 = arith.constant dense<0.000000e+00> : vector<32x2xf32>
    %21 = tpu.matmul %17, %20, %cst_10 {dimension_numbers = #tpu.dot_dimension_numbers<[1], [0], [0], [1], [0, 0, 1, 1], [], []>} : vector<32x2xf32>, vector<2x2xf32>, vector<32x2xf32> -> vector<32x2xf32>
    %cst_11 = arith.constant dense<0.000000e+00> : vector<32xf32>
    %22 = vector.multi_reduction <add>, %21, %cst_11 [1] : vector<32x2xf32> to vector<32xf32>
    %23 = vector.shape_cast %22 : vector<32xf32> to vector<32x1xf32>
    %24 = arith.negf %23 : vector<32x1xf32>
    %25 = math.exp %24 : vector<32x1xf32>
    %cst_12 = arith.constant 1.000000e+00 : f32
    %26 = vector.broadcast %cst_12 : f32 to vector<32x1xf32>
    %27 = arith.addf %26, %25 : vector<32x1xf32>
    %28 = arith.divf %26, %27 : vector<32x1xf32>
    %c0_13 = arith.constant 0 : index
    %c0_14 = arith.constant 0 : index
    %c0_15 = arith.constant 0 : index
    %29 = vector.load %arg5[%c0_13, %c0_14, %c0_15] : memref<1x32x1xf32, #tpu.memory_space<vmem>>, vector<1x32x1xf32>
    %30 = vector.shape_cast %29 : vector<1x32x1xf32> to vector<32x1xf32>
    %31 = vector.shape_cast %28 : vector<32x1xf32> to vector<1x32x1xf32>
    tpu.vector_store %arg5[%c0_13, %c0_14, %c0_15], %31 {strides = array<i32>} : memref<1x32x1xf32, #tpu.memory_space<vmem>>, vector<1x32x1xf32>,
    return
  }
  func.func @transform_0(%arg0: i32, %arg1: i32) -> (i32, i32, i32) {
    %c0_i32 = arith.constant 0 : i32
    %c0_i32_0 = arith.constant 0 : i32
    return %arg0, %c0_i32, %arg1 : i32, i32, i32
  }
  func.func @transform_1(%arg0: i32, %arg1: i32) -> (i32, i32) {
    %c0_i32 = arith.constant 0 : i32
    %c0_i32_0 = arith.constant 0 : i32
    %c0_i32_1 = arith.constant 0 : i32
    return %c0_i32, %c0_i32_0 : i32, i32
  }
  func.func @transform_2(%arg0: i32, %arg1: i32) -> (i32, i32) {
    %c0_i32 = arith.constant 0 : i32
    %c0_i32_0 = arith.constant 0 : i32
    %c0_i32_1 = arith.constant 0 : i32
    return %c0_i32, %c0_i32_0 : i32, i32
  }
  func.func @transform_3(%arg0: i32, %arg1: i32) -> (i32, i32, i32) {
    %c0_i32 = arith.constant 0 : i32
    %c0_i32_0 = arith.constant 0 : i32
    %c0_i32_1 = arith.constant 0 : i32
    return %arg0, %c0_i32, %c0_i32_0 : i32, i32, i32
  }
}

</mosaic_0001>

<llo_original>
// kernel: cab_forward.1
$region0: #{cab_forward.1}
  #allocation0 [shape = 'u32[]', space=smem, size = 0x4, offset = 0x4, fixed_abs, tag = 'smem constant byte address 0x4 - core index']
  #allocation1 [shape = 'u32[72,128]{1,0:T(1,128)}', space=vmem, size = 0x9000, scoped, tag = 'internal scratch']
  #allocation2 [shape = 'f32[32,128]{1,0:T(8,128)}', space=vmem, size = 0x4000, scoped, tag = 'scratch operand']
  #allocation3 [shape = 'f32[32,128]{1,0:T(8,128)}', space=vmem, size = 0x4000, scoped, tag = 'scratch operand']
  %s0 = inlined_call_operand.vmem [shape: f32[2,32,256], index: 0, kind: input, shape index: {}]
  %s1 = inlined_call_operand.vmem [shape: f32[2,32], index: 1, kind: input, shape index: {}]
  %s2 = inlined_call_operand.vmem [shape: f32[32,2], index: 2, kind: input, shape index: {}]
  %s3 = inlined_call_operand.vmem [shape: f32[2,32,1], index: 3, kind: output, shape index: {}]
  %s4 = sld [smem:[#allocation0]]
  $region45: #{cab_forward.1} parent=0
    _
  %s6 = ssub.s32 1, %s4
  %s7 = scalar_select 0, %s6, %s4
  loop: start=0, step=1, limit=4
  $region2: #{cab_forward.1} parent=0 // loop_pre_header
    _
  $region3: #{cab_forward.1} parent=0 // loop_header
    %s9 = sphi 0, %s13
    %p10 = scmp.ge.s32.totalorder %s9, 4
    %s16 = sphi 0, %s28
    %s17 = sphi 0, %s24
    %s18 = sphi 0, %s16
    %s19 = sphi 0, %s17
    %s20 = sphi 0, %s18
    %s21 = sphi 0, %s19
    %s33 = sphi 0, %s35
    %s36 = sphi 0, %s33
    %s37 = sphi 0, %s36
    %s53 = sphi 0, %s37
    %s57 = sphi 0, %s57
    %s59 = sphi 0, %s57
    %s60 = sphi 0, %s59
    %s74 = sphi 0, %s60
    %s78 = sphi 0, %s78
    %s80 = sphi 0, %s78
    %s81 = sphi 0, %s80
    %s95 = sphi 0, %s81
    %s101 = sphi 0, %s103
    %s104 = sphi 0, %s101
    %s105 = sphi 0, %s104
    %s121 = sphi 0, %s105
  $region4: #{cab_forward.1} parent=0 // loop_header_branch
    %12 = sbr.rel (%p10) target = $region8
  $region5: #{cab_forward.1} parent=0 // loop_body
    %s14 = ssub.s32 %s9, 1
    %s15 = ssub.s32 %s9, 2
    %s22 = sadd.s32 1, %s17
    %p23 = scmp.ge.s32.totalorder %s22, 1
    %s24 = scalar_select %p23, 0, %s22
    %s25 = sadd.s32 1, %s16
    %s26 = scalar_select %p23, %s25, %s16
    %p27 = scmp.ge.s32.totalorder %s26, 2
    %s28 = scalar_select %p27, 0, %s26
    %s29 = ssub.s32 %s16, %s28
    %s30 = ssub.s32 %s17, %s24
    %s31 = sor.u32 %s29, %s30
    %p32 = scmp.eq.s32.totalorder %s31, 0
    %s34 = sadd.s32 %s33, 1
    %s35 = scalar_select %p32, %s33, %s34
    %p38 = pneg %p32
    %p39 = scmp.eq.s32.totalorder %s9, 1
    %p40 = por %p38, %p39
    %p41 = scmp.ne.s32.totalorder %s33, %s36
    %p42 = scmp.eq.s32.totalorder %s9, 0
    %p43 = por %p41, %p42
    %p44 = scmp.ne.s32.totalorder %s33, %s36
    %p45 = scmp.eq.s32.totalorder %s14, 1
    %p46 = por %p44, %p45
    %p47 = scmp.ne.s32.totalorder %s36, %s37
    %p48 = scmp.eq.s32.totalorder %s14, 0
    %p49 = por %p47, %p48
    %p50 = scmp.ne.s32.totalorder %s36, %s37
    %p51 = scmp.eq.s32.totalorder %s15, 1
    %p52 = por %p50, %p51
    %p54 = scmp.ne.s32.totalorder %s37, %s53
    %p55 = scmp.eq.s32.totalorder %s15, 0
    %p56 = por %p54, %p55
    %s58 = sadd.s32 %s57, 1
    %p61 = scmp.eq.s32.totalorder %s9, 1
    %p62 = scmp.ne.s32.totalorder %s57, %s59
    %p63 = scmp.eq.s32.totalorder %s9, 0
    %p64 = por %p62, %p63
    %p65 = scmp.ne.s32.totalorder %s57, %s59
    %p66 = scmp.eq.s32.totalorder %s14, 1
    %p67 = por %p65, %p66
    %p68 = scmp.ne.s32.totalorder %s59, %s60
    %p69 = scmp.eq.s32.totalorder %s14, 0
    %p70 = por %p68, %p69
    %p71 = scmp.ne.s32.totalorder %s59, %s60
    %p72 = scmp.eq.s32.totalorder %s15, 1
    %p73 = por %p71, %p72
    %p75 = scmp.ne.s32.totalorder %s60, %s74
    %p76 = scmp.eq.s32.totalorder %s15, 0
    %p77 = por %p75, %p76
    %s79 = sadd.s32 %s78, 1
    %p82 = scmp.eq.s32.totalorder %s9, 1
    %p83 = scmp.ne.s32.totalorder %s78, %s80
    %p84 = scmp.eq.s32.totalorder %s9, 0
    %p85 = por %p83, %p84
    %p86 = scmp.ne.s32.totalorder %s78, %s80
    %p87 = scmp.eq.s32.totalorder %s14, 1
    %p88 = por %p86, %p87
    %p89 = scmp.ne.s32.totalorder %s80, %s81
    %p90 = scmp.eq.s32.totalorder %s14, 0
    %p91 = por %p89, %p90
    %p92 = scmp.ne.s32.totalorder %s80, %s81
    %p93 = scmp.eq.s32.totalorder %s15, 1
    %p94 = por %p92, %p93
    %p96 = scmp.ne.s32.totalorder %s81, %s95
    %p97 = scmp.eq.s32.totalorder %s15, 0
    %p98 = por %p96, %p97
    %s99 = ssub.s32 %s16, %s28
    %p100 = scmp.eq.s32.totalorder %s99, 0
    %s102 = sadd.s32 %s101, 1
    %s103 = scalar_select %p100, %s101, %s102
    %p106 = pneg %p100
    %p107 = scmp.eq.s32.totalorder %s9, 1
    %p108 = por %p106, %p107
    %p109 = scmp.ne.s32.totalorder %s101, %s104
    %p110 = scmp.eq.s32.totalorder %s9, 0
    %p111 = por %p109, %p110
    %p112 = scmp.ne.s32.totalorder %s101, %s104
    %p113 = scmp.eq.s32.totalorder %s14, 1
    %p114 = por %p112, %p113
    %p115 = scmp.ne.s32.totalorder %s104, %s105
    %p116 = scmp.eq.s32.totalorder %s14, 0
    %p117 = por %p115, %p116
    %p118 = scmp.ne.s32.totalorder %s104, %s105
    %p119 = scmp.eq.s32.totalorder %s15, 1
    %p120 = por %p118, %p119
    %p122 = scmp.ne.s32.totalorder %s105, %s121
    %p123 = scmp.eq.s32.totalorder %s15, 0
    %p124 = por %p122, %p123
    %p125 = scmp.le.s32.totalorder 1, %s9
    %p126 = scmp.lt.s32.totalorder %s9, 3
    %p127 = pnand %p125, %p126
    %p128 = pneg %p127
    // Predicated region
    $region9: #{cab_forward.1} parent=5 // pred_check
      _
    $region10: #{cab_forward.1} parent=5 // pred_check_branch
      %130 = sbr.rel (%p127) target = $region12
    $region11: #{cab_forward.1} parent=5 // pred_region
      %s131 = ssub.s32 %s9, 1
      // Predicated region
      $region13: #{cab_forward.1} parent=11 // pred_check
        %p132 = pneg %p70
      $region14: #{cab_forward.1} parent=11 // pred_check_branch
        %134 = sbr.rel (%p132) target = $region16
      $region15: #{cab_forward.1} parent=11 // pred_region
        _
      $region16: #{cab_forward.1} parent=11 // pred_fallthru
        _
      // Predicated region
      $region17: #{cab_forward.1} parent=11 // pred_check
        %p135 = pneg %p91
      $region18: #{cab_forward.1} parent=11 // pred_check_branch
        %137 = sbr.rel (%p135) target = $region20
      $region19: #{cab_forward.1} parent=11 // pred_region
        _
      $region20: #{cab_forward.1} parent=11 // pred_fallthru
        _
    $region12: #{cab_forward.1} parent=5 // pred_fallthru
      _
    %p138 = scmp.lt.s32.totalorder %s9, 2
    // Predicated region
    $region21: #{cab_forward.1} parent=5 // pred_check
      %p139 = pneg %p138
    $region22: #{cab_forward.1} parent=5 // pred_check_branch
      %141 = sbr.rel (%p139) target = $region24
    $region23: #{cab_forward.1} parent=5 // pred_region
      // Predicated region
      $region25: #{cab_forward.1} parent=23 // pred_check
        %p142 = pneg %p43
      $region26: #{cab_forward.1} parent=23 // pred_check_branch
        %144 = sbr.rel (%p142) target = $region28
      $region27: #{cab_forward.1} parent=23 // pred_region
        %s145 = smul.u32 2, %s17
        %p146 = scmp.lt.s32.totalorder %s16, 1
        %s147 = scalar_select %p146, %s16, 1
        %p148 = scmp.lt.s32.totalorder %s145, 1
        %s149 = scalar_select %p148, %s145, 1
        %s150 = smul.addr %s147, 8
        %s151 = sadd.s32 %s149, %s150
        %s152 = smul.addr %s151, 8
        %s153 = scalar_lea.vmem %s0, %s152
        %s154 = smul.u32 2, %s17
      $region28: #{cab_forward.1} parent=23 // pred_fallthru
        _
    $region24: #{cab_forward.1} parent=5 // pred_fallthru
      _
    %p155 = scmp.le.s32.totalorder 1, %s9
    %p156 = scmp.lt.s32.totalorder %s9, 3
    %p157 = pnand %p155, %p156
    %p158 = pneg %p157
    // Predicated region
    $region29: #{cab_forward.1} parent=5 // pred_check
      _
    $region30: #{cab_forward.1} parent=5 // pred_check_branch
      %160 = sbr.rel (%p157) target = $region32
    $region31: #{cab_forward.1} parent=5 // pred_region
      %s161 = ssub.s32 %s9, 1
      %s162 = smul.u32 2, %s19
      %p163 = scmp.lt.s32.totalorder %s18, 1
      %s164 = scalar_select %p163, %s18, 1
      %p165 = scmp.lt.s32.totalorder %s162, 1
      %s166 = scalar_select %p165, %s162, 1
      %s167 = smul.addr %s164, 8
      %s168 = sadd.s32 %s166, %s167
      %s169 = smul.addr %s168, 8
      %s170 = scalar_lea.vmem %s0, %s169
      %p171 = pneg %p49
      %p172 = pneg %p46
      %p173 = pneg %p70
      %p174 = pneg %p67
      %p175 = pneg %p91
      %p176 = pneg %p88
      %p177 = pneg %p117
      %p178 = pneg %p114
      %p179 = scmp.lt.s32.totalorder %s18, 1
      %s180 = scalar_select %p179, %s18, 1
      %s181 = smul.addr %s180, 4
      %s182 = smul.addr %s181, 8
      %s183 = scalar_lea.vmem %s3, %s182
      %s184 = smul.u32 2, %s19
      %p185 = scmp.lt.s32.totalorder %s18, 1
      %s186 = scalar_select %p185, %s18, 1
      %p187 = scmp.lt.s32.totalorder %s184, 1
      %s188 = scalar_select %p187, %s184, 1
      %s189 = smul.addr %s186, 8
      %s190 = sadd.s32 %s188, %s189
      %s191 = smul.addr %s190, 8
      %s192 = scalar_lea.vmem %s0, %s191
      %s193 = smul.u32 2, %s19
      %p194 = scmp.lt.s32.totalorder %s18, 1
      %s195 = scalar_select %p194, %s18, 1
      %s196 = smul.addr %s195, 4
      %s197 = smul.addr %s196, 8
      %s198 = scalar_lea.vmem %s3, %s197
      %v199 = vld [vmem:[%s192] sm:$0xff]
      %v200 = vld [vmem:[%s192 + $0x8] sm:$0xff]
      %v201 = vld [vmem:[%s192 + $0x10] sm:$0xff]
      %v202 = vld [vmem:[%s192 + $0x18] sm:$0xff]
      %v203 = vld [vmem:[%s192 + $0x20] sm:$0xff]
      %v204 = vld [vmem:[%s192 + $0x28] sm:$0xff]
      %v205 = vld [vmem:[%s192 + $0x30] sm:$0xff]
      %v206 = vld [vmem:[%s192 + $0x38] sm:$0xff]
      %v207 = vadd.f32 %v199, %v200
      %208 = vadd.xlane.f32.xlu0 %v207
      %v209 = vpop.xlane.xlu0 %208
      %v210 = vadd.f32 %v201, %v202
      %211 = vadd.xlane.f32.xlu0 %v210
      %v212 = vpop.xlane.xlu0 %211
      %v213 = vadd.f32 %v203, %v204
      %214 = vadd.xlane.f32.xlu0 %v213
      %v215 = vpop.xlane.xlu0 %214
      %v216 = vadd.f32 %v205, %v206
      %217 = vadd.xlane.f32.xlu0 %v216
      %v218 = vpop.xlane.xlu0 %217
      %v219 = vmul.f32 %v209, 0.00390625
      %v220 = vmul.f32 %v212, 0.00390625
      %v221 = vmul.f32 %v215, 0.00390625
      %v222 = vmul.f32 %v218, 0.00390625
      %v223 = vmax.f32 %v199, %v200
      %224 = vmax.xlane.f32.xlu0 %v223
      %v225 = vpop.xlane.xlu0 %224
      %v226 = vmax.f32 %v201, %v202
      %227 = vmax.xlane.f32.xlu0 %v226
      %v228 = vpop.xlane.xlu0 %227
      %v229 = vmax.f32 %v203, %v204
      %230 = vmax.xlane.f32.xlu0 %v229
      %v231 = vpop.xlane.xlu0 %230
      %v232 = vmax.f32 %v205, %v206
      %233 = vmax.xlane.f32.xlu0 %v232
      %v234 = vpop.xlane.xlu0 %233
      %v235 = vlaneseq
      %v236 = vand.u32 %v235, 127
      %vm237 = vcmp.eq.s32.totalorder %v236, 0
      %v238 = vsel %vm237, %v219, %v225
      %v239 = vsel %vm237, %v220, %v228
      %v240 = vsel %vm237, %v221, %v231
      %v241 = vsel %vm237, %v222, %v234
      %v242 = vld [vmem:[%s1] sm:$0x3]
      %v243 = vld [vmem:[%s2] sm:$0xff]
      %v244 = vld [vmem:[%s2 + $0x8] sm:$0xff]
      %v245 = vld [vmem:[%s2 + $0x10] sm:$0xff]
      %v246 = vld [vmem:[%s2 + $0x18] sm:$0xff]
      %vm247 = vcmask 261120
      %v249 = vsel %vm247, %v242, 0
      %251 = vmatpush.msra.mxu0 0.0
      %252 = vmatpush.msra.mxu0 0.0
      %253 = vmatpush.msra.mxu0 0.0
      %254 = vmatpush.msra.mxu0 0.0
      %255 = vmatpush.msra.mxu0 0.0
      %256 = vmatpush.msra.mxu0 0.0
      %257 = vmatpush.msra.mxu0 0.0
      %258 = vmatpush.msra.mxu0 0.0
      %259 = vmatpush.msra.mxu0 0.0
      %260 = vmatpush.msra.mxu0 0.0
      %261 = vmatpush.msra.mxu0 0.0
      %262 = vmatpush.msra.mxu0 0.0
      %263 = vmatpush.msra.mxu0 %v241
      %264 = vmatpush.msra.mxu0 %v240
      %265 = vmatpush.msra.mxu0 %v239
      %266 = vmatpush.msra.mxu0 %v238
      %267 = vmatmul.f32.gmra.mxu0 %v249
      %v268 = vpop.f32.mrf.mxu0
      %v269 = vadd.f32 0.0, %v268
      %270 = vdwg.mxu0
      %v271 = vmax.f32 %v269, 0.0
      %vm272 = vcmask 15360
      %v274 = vsel %vm272, %v243, 0
      %v277 = vsel %vm272, %v244, 0
      %v280 = vsel %vm272, %v245, 0
      %v283 = vsel %vm272, %v246, 0
      %vm285 = vcmask 1041408
      %v287 = vsel %vm285, %v271, 0
      %289 = vmatpush.msra.mxu0 0.0
      %290 = vmatpush.msra.mxu0 0.0
      %291 = vmatpush.msra.mxu0 0.0
      %292 = vmatpush.msra.mxu0 0.0
      %293 = vmatpush.msra.mxu0 0.0
      %294 = vmatpush.msra.mxu0 0.0
      %295 = vmatpush.msra.mxu0 0.0
      %296 = vmatpush.msra.mxu0 0.0
      %297 = vmatpush.msra.mxu0 0.0
      %298 = vmatpush.msra.mxu0 0.0
      %299 = vmatpush.msra.mxu0 0.0
      %300 = vmatpush.msra.mxu0 0.0
      %301 = vmatpush.msra.mxu0 0.0
      %302 = vmatpush.msra.mxu0 0.0
      %303 = vmatpush.msra.mxu0 0.0
      %304 = vmatpush.msra.mxu0 %v287
      %305 = vmatmul.f32.gmra.mxu0 %v274
      %v306 = vpop.f32.mrf.mxu0
      %v307 = vadd.f32 0.0, %v306
      %308 = vmatmul.f32.gmra.mxu0 %v277
      %v309 = vpop.f32.mrf.mxu0
      %v310 = vadd.f32 0.0, %v309
      %311 = vmatmul.f32.gmra.mxu0 %v280
      %v312 = vpop.f32.mrf.mxu0
      %v313 = vadd.f32 0.0, %v312
      %314 = vmatmul.f32.gmra.mxu0 %v283
      %v315 = vpop.f32.mrf.mxu0
      %v316 = vadd.f32 0.0, %v315
      %317 = vdwg.mxu0
      %v318 = vsel %vm272, %v307, 0.0
      %319 = vadd.xlane.f32.xlu0 %v318
      %v320 = vpop.xlane.xlu0 %319
      %v321 = vsel %vm272, %v310, 0.0
      %322 = vadd.xlane.f32.xlu0 %v321
      %v323 = vpop.xlane.xlu0 %322
      %v324 = vsel %vm272, %v313, 0.0
      %325 = vadd.xlane.f32.xlu0 %v324
      %v326 = vpop.xlane.xlu0 %325
      %v327 = vsel %vm272, %v316, 0.0
      %328 = vadd.xlane.f32.xlu0 %v327
      %v329 = vpop.xlane.xlu0 %328
      %v330 = vxor.u32 %v320, 2147483648
      %v331 = vxor.u32 %v323, 2147483648
      %v332 = vxor.u32 %v326, 2147483648
      %v333 = vxor.u32 %v329, 2147483648
      %v334 = vmul.f32 %v330, 1.442695
      %v335 = vpow.pop %v334
      %v336 = vmul.f32 %v331, 1.442695
      %v337 = vpow.pop %v336
      %v338 = vmul.f32 %v332, 1.442695
      %v339 = vpow.pop %v338
      %v340 = vmul.f32 %v333, 1.442695
      %v341 = vpow.pop %v340
      %v342 = vadd.f32 %v335, 1.0
      %v343 = vadd.f32 %v337, 1.0
      %v344 = vadd.f32 %v339, 1.0
      %v345 = vadd.f32 %v341, 1.0
      %v346 = vrcp.pop %v342
      %v347 = vmul.f32 %v342, %v346
      %v348 = vsub.f32 1.0, %v347
      %v349 = vmul.f32 %v346, %v348
      %v350 = vadd.f32 %v346, %v349
      %vm351 = vweird.f32 %v342
      %vm352 = vweird.f32 %v346
      %vm353 = vmor %vm351, %vm352
      %v354 = vsel %vm353, %v346, %v350
      %v355 = vand.u32 2147483647, %v342
      %vm356 = vcmp.eq.f32.partialorder %v355, 8.507059e+37
      %v357 = vand.u32 %v342, 2147483648
      %v358 = vor.u32 1.1754944e-38, %v357
      %v359 = vsel %vm356, %v358, %v354
      %v360 = vmul.f32 1.0, %v359
      %v361 = vrcp.pop %v343
      %v362 = vmul.f32 %v343, %v361
      %v363 = vsub.f32 1.0, %v362
      %v364 = vmul.f32 %v361, %v363
      %v365 = vadd.f32 %v361, %v364
      %vm366 = vweird.f32 %v343
      %vm367 = vweird.f32 %v361
      %vm368 = vmor %vm366, %vm367
      %v369 = vsel %vm368, %v361, %v365
      %v370 = vand.u32 2147483647, %v343
      %vm371 = vcmp.eq.f32.partialorder %v370, 8.507059e+37
      %v372 = vand.u32 %v343, 2147483648
      %v373 = vor.u32 1.1754944e-38, %v372
      %v374 = vsel %vm371, %v373, %v369
      %v375 = vmul.f32 1.0, %v374
      %v376 = vrcp.pop %v344
      %v377 = vmul.f32 %v344, %v376
      %v378 = vsub.f32 1.0, %v377
      %v379 = vmul.f32 %v376, %v378
      %v380 = vadd.f32 %v376, %v379
      %vm381 = vweird.f32 %v344
      %vm382 = vweird.f32 %v376
      %vm383 = vmor %vm381, %vm382
      %v384 = vsel %vm383, %v376, %v380
      %v385 = vand.u32 2147483647, %v344
      %vm386 = vcmp.eq.f32.partialorder %v385, 8.507059e+37
      %v387 = vand.u32 %v344, 2147483648
      %v388 = vor.u32 1.1754944e-38, %v387
      %v389 = vsel %vm386, %v388, %v384
      %v390 = vmul.f32 1.0, %v389
      %v391 = vrcp.pop %v345
      %v392 = vmul.f32 %v345, %v391
      %v393 = vsub.f32 1.0, %v392
      %v394 = vmul.f32 %v391, %v393
      %v395 = vadd.f32 %v391, %v394
      %vm396 = vweird.f32 %v345
      %vm397 = vweird.f32 %v391
      %vm398 = vmor %vm396, %vm397
      %v399 = vsel %vm398, %v391, %v395
      %v400 = vand.u32 2147483647, %v345
      %vm401 = vcmp.eq.f32.partialorder %v400, 8.507059e+37
      %v402 = vand.u32 %v345, 2147483648
      %v403 = vor.u32 1.1754944e-38, %v402
      %v404 = vsel %vm401, %v403, %v399
      %v405 = vmul.f32 1.0, %v404
      %vm406 = vcmask 7168
      %407 = vst.msk [vmem:[%s198] sm:$0xff] %vm406, %v360
      %408 = vst.msk [vmem:[%s198 + $0x8] sm:$0xff] %vm406, %v375
      %409 = vst.msk [vmem:[%s198 + $0x10] sm:$0xff] %vm406, %v390
      %410 = vst.msk [vmem:[%s198 + $0x18] sm:$0xff] %vm406, %v405
      %p411 = scmp.lt.s32.totalorder %s18, 1
      %s412 = scalar_select %p411, %s18, 1
      %s413 = smul.addr %s412, 4
      %s414 = smul.addr %s413, 8
      %s415 = scalar_lea.vmem %s3, %s414
      // Predicated region
      $region33: #{cab_forward.1} parent=31 // pred_check
        %p416 = pneg %p114
      $region34: #{cab_forward.1} parent=31 // pred_check_branch
        %418 = sbr.rel (%p416) target = $region36
      $region35: #{cab_forward.1} parent=31 // pred_region
        _
      $region36: #{cab_forward.1} parent=31 // pred_fallthru
        _
    $region32: #{cab_forward.1} parent=5 // pred_fallthru
      _
    %p419 = scmp.le.s32.totalorder 2, %s9
    // Predicated region
    $region37: #{cab_forward.1} parent=5 // pred_check
      %p420 = pneg %p419
    $region38: #{cab_forward.1} parent=5 // pred_check_branch
      %422 = sbr.rel (%p420) target = $region40
    $region39: #{cab_forward.1} parent=5 // pred_region
      %s423 = ssub.s32 %s9, 2
      // Predicated region
      $region41: #{cab_forward.1} parent=39 // pred_check
        %p424 = pneg %p120
      $region42: #{cab_forward.1} parent=39 // pred_check_branch
        %426 = sbr.rel (%p424) target = $region44
      $region43: #{cab_forward.1} parent=39 // pred_region
        %p427 = scmp.lt.s32.totalorder %s20, 1
        %s428 = scalar_select %p427, %s20, 1
        %s429 = smul.addr %s428, 4
        %s430 = smul.addr %s429, 8
        %s431 = scalar_lea.vmem %s3, %s430
      $region44: #{cab_forward.1} parent=39 // pred_fallthru
        _
    $region40: #{cab_forward.1} parent=5 // pred_fallthru
      _
  $region6: #{cab_forward.1} parent=0 // loop_footer
    %s13 = sadd.s32 1, %s9
  $region7: #{cab_forward.1} parent=0 // loop_footer_branch
    %8 = sbr.rel target = $region3
  $region8: #{cab_forward.1} parent=0 // loop_exit
    _

</llo_original>
